<compile_context>
chip_gen: v7x
topology: tpu7x:2x2x1
jax: 0.10.0
libtpu: 0.0.40
codegen_flags: <defaults>
</compile_context>

<pallas_src>
import functools

import jax
import jax.numpy as jnp
from jax.experimental import pallas as pl
from jax.experimental.pallas import tpu as pltpu


# ---------------------------------------------------------------------------
# Pallas kernel: fused dual-head linear + per-head softmax, lane-dense output
# ---------------------------------------------------------------------------
def fused_heads_kernel(x_ref, w_ref, b_ref, o_ref, *, num_a, num_o):
    # x_ref: (tm, H) bf16 tile; w_ref: (H, NPAD) bf16; b_ref: (1, NPAD) f32
    s = jnp.dot(x_ref[...], w_ref[...], preferred_element_type=jnp.float32)
    s = s + b_ref[...]                                       # (tm, NPAD) f32 logits

    col = jax.lax.broadcasted_iota(jnp.int32, s.shape, dimension=1)
    in_a = col < num_a
    in_o = (col >= num_a) & (col < num_a + num_o)
    neg = jnp.float32(-1e30)

    # Per-group row maxima, then a single masked exp pass over the whole tile.
    m_a = jnp.max(jnp.where(in_a, s, neg), axis=-1, keepdims=True)
    m_o = jnp.max(jnp.where(in_o, s, neg), axis=-1, keepdims=True)
    s_masked = jnp.where(in_a | in_o, s, neg)                # padded cols -> -1e30
    e = jnp.exp(s_masked - jnp.where(in_a, m_a, m_o))        # padded cols -> 0

    sum_a = jnp.sum(jnp.where(in_a, e, 0.0), axis=-1, keepdims=True)
    sum_o = jnp.sum(jnp.where(in_a, 0.0, e), axis=-1, keepdims=True)
    denom = jnp.where(in_a, sum_a, sum_o)

    # Exact division: every softmax row is normalized to f32 precision.
    # (approx reciprocal previously broke the sum-to-1 property.)
    o_ref[...] = (e / denom).astype(o_ref.dtype)


def _num_tensorcores():
    """Best-effort TensorCore count (v7x = 2).  Defaults to 1, never raises."""
    try:
        info = pltpu.get_tpu_info()
        for attr in ("num_cores", "tensor_cores_per_chip", "num_tensorcores"):
            v = getattr(info, attr, None)
            if v:
                return int(v)
    except Exception:
        pass
    return 1


def _pick_tm(m_pad, num_cores=1, max_tm=1024):
    """Largest row tile dividing m_pad.  On multi-TC chips, prefer a grid that is a
    multiple of the core count as long as the tile stays >= 512 (never sacrifice
    tile size on single-TC v5e/v6e)."""
    candidates = [t for t in (1024, 512, 256, 128, 64, 32, 16) if t <= max_tm]
    if num_cores > 1:
        for tm in candidates:
            if tm >= 512 and m_pad % tm == 0 and (m_pad // tm) % num_cores == 0:
                return tm
    for tm in candidates:
        if m_pad % tm == 0:
            return tm
    return 16


def prepare_fused_heads(w1, b1, w2, b2):
    """One-time param prep: lane-padded fused weight [H, NPAD] (bf16) + bias [1, NPAD] (f32)."""
    H, A = w1.shape
    O = w2.shape[1]
    NPAD = max(128, ((A + O + 127) // 128) * 128)
    w_fused = jnp.zeros((H, NPAD), jnp.float32)
    w_fused = w_fused.at[:, :A].set(w1).at[:, A:A + O].set(w2).astype(jnp.bfloat16)
    b_fused = jnp.zeros((1, NPAD), jnp.float32)
    b_fused = b_fused.at[0, :A].set(b1).at[0, A:A + O].set(b2)
    return w_fused, b_fused


def classification_heads(token_embeddings, w_fused, b_fused, num_a, num_o):
    """token_embeddings: [B, S, H] (bf16 preferred) -> (aspect [B,S,A], opinion [B,S,O])."""
    B, S, H = token_embeddings.shape
    A, O = num_a, num_o
    NPAD = w_fused.shape[1]
    M = B * S

    # Rows rounded to a multiple of 16 (bf16 sublane packing); largest dividing tile.
    M_pad = ((M + 15) // 16) * 16
    tm = _pick_tm(M_pad, num_cores=_num_tensorcores())
    grid = (M_pad // tm,)

    # Backbone already emits bf16, so this reshape/cast does not add an HBM pass.
    x2d = token_embeddings.reshape(M, H)
    if x2d.dtype != jnp.bfloat16:
        x2d = x2d.astype(jnp.bfloat16)
    if M_pad != M:
        x2d = jnp.pad(x2d, ((0, M_pad - M), (0, 0)))

    # VMEM: double-buffered x + out tiles, resident weight + bias, plus slack.
    tile_bytes = 2 * (tm * H * 2 + tm * NPAD * 4) + (H * NPAD * 2 + NPAD * 4)
    vmem_limit = min(max(8 << 20, int(1.25 * tile_bytes) + (1 << 20)), 32 << 20)

    cost = pl.CostEstimate(
        flops=2 * M_pad * H * NPAD,
        transcendentals=M_pad * NPAD,
        bytes_accessed=M_pad * H * 2 + M_pad * NPAD * 4 + H * NPAD * 2 + NPAD * 4,
    )

    kernel = functools.partial(fused_heads_kernel, num_a=A, num_o=O)
    probs = pl.pallas_call(
        kernel,
        out_shape=jax.ShapeDtypeStruct((M_pad, NPAD), jnp.float32),
        grid=grid,
        in_specs=[
            pl.BlockSpec((tm, H), lambda i: (i, 0)),     # x tile (bf16)
            pl.BlockSpec((H, NPAD), lambda i: (0, 0)),   # fused weight, resident
            pl.BlockSpec((1, NPAD), lambda i: (0, 0)),   # fused bias, resident
        ],
        out_specs=pl.BlockSpec((tm, NPAD), lambda i: (i, 0)),
        compiler_params=pltpu.CompilerParams(
            dimension_semantics=("parallel",),
            vmem_limit_bytes=vmem_limit,
        ),
        cost_estimate=cost,
    )(x2d, w_fused, b_fused)

    # Single narrow slice, then split the two heads.
    head = probs[:M, :A + O]
    aspect_probs = head[:, :A].reshape(B, S, A)
    opinion_probs = head[:, A:].reshape(B, S, O)
    return aspect_probs, opinion_probs


# ---------------------------------------------------------------------------
# Synthetic deterministic mini-BERT encoder (plain JAX glue, not the hot path)
# ---------------------------------------------------------------------------
def _layernorm(x, g, b, eps=1e-12):
    mu = jnp.mean(x, axis=-1, keepdims=True)
    var = jnp.mean((x - mu) ** 2, axis=-1, keepdims=True)
    return (x - mu) * jax.lax.rsqrt(var + eps) * g + b


def mini_bert_last_hidden_state(params, input_ids, attention_mask):
    """input_ids: [B, S] int32; attention_mask: [B, S] (1 = keep, 0 = pad).
    Returns last_hidden_state in bf16 (cast fused into the producer; the heads
    kernel consumes bf16 directly, avoiding a standalone cast pass over HBM)."""
    p = params
    B, S = input_ids.shape
    h = p["tok_emb"][input_ids] + p["pos_emb"][None, :S, :]
    h = _layernorm(h, p["ln0_g"], p["ln0_b"])

    # single-head self-attention
    q = h @ p["wq"] + p["bq"]
    k = h @ p["wk"] + p["bk"]
    v = h @ p["wv"] + p["bv"]
    H = q.shape[-1]
    scores = jnp.einsum("bqd,bkd->bqk", q, k) / jnp.sqrt(jnp.float32(H))
    mask = (attention_mask[:, None, :] != 0)
    scores = jnp.where(mask, scores, jnp.float32(-1e9))
    attn = jax.nn.softmax(scores, axis=-1)
    ctx = jnp.einsum("bqk,bkd->bqd", attn, v) @ p["wo"] + p["bo"]
    h = _layernorm(h + ctx, p["ln1_g"], p["ln1_b"])

    # feed-forward
    ff = jax.nn.gelu(h @ p["w_ff1"] + p["b_ff1"]) @ p["w_ff2"] + p["b_ff2"]
    h = _layernorm(h + ff, p["ln2_g"], p["ln2_b"])
    return h.astype(jnp.bfloat16)  # last_hidden_state [B, S, H], bf16


def init_params(key, vocab_size, max_seq, hidden, ffn, num_aspects, num_opinions):
    ks = jax.random.split(key, 16)
    s = 0.02
    f32 = jnp.float32
    params = {
        "tok_emb": jax.random.normal(ks[0], (vocab_size, hidden), f32) * s,
        "pos_emb": jax.random.normal(ks[1], (max_seq, hidden), f32) * s,
        "ln0_g": jnp.ones((hidden,), f32), "ln0_b": jnp.zeros((hidden,), f32),
        "wq": jax.random.normal(ks[2], (hidden, hidden), f32) * s,
        "bq": jnp.zeros((hidden,), f32),
        "wk": jax.random.normal(ks[3], (hidden, hidden), f32) * s,
        "bk": jnp.zeros((hidden,), f32),
        "wv": jax.random.normal(ks[4], (hidden, hidden), f32) * s,
        "bv": jnp.zeros((hidden,), f32),
        "wo": jax.random.normal(ks[5], (hidden, hidden), f32) * s,
        "bo": jnp.zeros((hidden,), f32),
        "ln1_g": jnp.ones((hidden,), f32), "ln1_b": jnp.zeros((hidden,), f32),
        "w_ff1": jax.random.normal(ks[6], (hidden, ffn), f32) * s,
        "b_ff1": jnp.zeros((ffn,), f32),
        "w_ff2": jax.random.normal(ks[7], (ffn, hidden), f32) * s,
        "b_ff2": jnp.zeros((hidden,), f32),
        "ln2_g": jnp.ones((hidden,), f32), "ln2_b": jnp.zeros((hidden,), f32),
        # classification heads (nn.Linear: y = x @ W^T + b; we store W^T directly)
        "fc1_w": jax.random.normal(ks[8], (hidden, num_aspects), f32) * s,
        "fc1_b": jax.random.normal(ks[9], (num_aspects,), f32) * s,
        "fc2_w": jax.random.normal(ks[10], (hidden, num_opinions), f32) * s,
        "fc2_b": jax.random.normal(ks[11], (num_opinions,), f32) * s,
    }
    # One-time fused-head prep (hoisted out of the per-call forward path).
    params["head_w_fused"], params["head_b_fused"] = prepare_fused_heads(
        params["fc1_w"], params["fc1_b"], params["fc2_w"], params["fc2_b"])
    return params


@jax.jit
def classification_model_forward(params, input_ids, attention_mask):
    token_embeddings = mini_bert_last_hidden_state(params, input_ids, attention_mask)
    num_a = params["fc1_b"].shape[0]
    num_o = params["fc2_b"].shape[0]
    aspect_probs, opinion_probs = classification_heads(
        token_embeddings, params["head_w_fused"], params["head_b_fused"], num_a, num_o)
    return aspect_probs, opinion_probs


# ---------------------------------------------------------------------------
if __name__ == "__main__":
    B, S, H, FFN = 2, 8, 32, 64
    VOCAB = 50
    NUM_ASPECTS, NUM_OPINIONS = 6, 4

    key = jax.random.PRNGKey(0)
    k_param, k_ids = jax.random.split(key)
    params = init_params(k_param, VOCAB, S, H, FFN, NUM_ASPECTS, NUM_OPINIONS)

    input_ids = jax.random.randint(k_ids, (B, S), 0, VOCAB, dtype=jnp.int32)
    attention_mask = jnp.ones((B, S), dtype=jnp.int32).at[1, 6:].set(0)  # pad tail of seq 1

    aspect_probs, opinion_probs = classification_model_forward(
        params, input_ids, attention_mask)
    jax.block_until_ready((aspect_probs, opinion_probs))

    # Reference for the Pallas heads: same bf16 input/weight rounding, f32 math.
    te = mini_bert_last_hidden_state(params, input_ids, attention_mask)  # bf16
    x_f = te.astype(jnp.float32)
    w1_bf = params["fc1_w"].astype(jnp.bfloat16).astype(jnp.float32)
    w2_bf = params["fc2_w"].astype(jnp.bfloat16).astype(jnp.float32)
    ref1 = jax.nn.softmax(x_f @ w1_bf + params["fc1_b"], axis=-1)
    ref2 = jax.nn.softmax(x_f @ w2_bf + params["fc2_b"], axis=-1)

    assert aspect_probs.shape == (B, S, NUM_ASPECTS)
    assert opinion_probs.shape == (B, S, NUM_OPINIONS)
    assert jnp.allclose(aspect_probs, ref1, atol=2e-3, rtol=2e-3)
    assert jnp.allclose(opinion_probs, ref2, atol=2e-3, rtol=2e-3)
    # Exact division in the kernel -> rows normalized to f32 precision.
    assert jnp.allclose(jnp.sum(aspect_probs, -1), 1.0, atol=2e-3)
    assert jnp.allclose(jnp.sum(opinion_probs, -1), 1.0, atol=2e-3)

    print("KERNEL_OK")
</pallas_src>

<mosaic_0001>
module attributes {stable_mosaic.version = 11 : i64} {
  func.func @fused_heads_kernel(%arg0: i32, %arg1: memref<16x32xbf16, #tpu.memory_space<vmem>>, %arg2: memref<32x128xbf16, #tpu.memory_space<vmem>>, %arg3: memref<1x128xf32, #tpu.memory_space<vmem>>, %arg4: memref<16x128xf32, #tpu.memory_space<vmem>>) attributes {dimension_semantics = [#tpu.dimension_semantics<parallel>], iteration_bounds = array<i64: 1>, scalar_prefetch = 0 : i64, scratch_operands = 0 : i64, tpu.core_type = #tpu.core_type<tc>, window_params = [{transform_indices = @transform_0, window_bounds = array<i64: 16, 32>}, {pipeline_mode = #tpu.pipeline_mode<synchronous>, transform_indices = @transform_1, window_bounds = array<i64: 32, 128>}, {pipeline_mode = #tpu.pipeline_mode<synchronous>, transform_indices = @transform_2, window_bounds = array<i64: 1, 128>}, {transform_indices = @transform_3, window_bounds = array<i64: 16, 128>}]} {
    %c0 = arith.constant 0 : index
    %c0_0 = arith.constant 0 : index
    %0 = vector.load %arg1[%c0, %c0_0] : memref<16x32xbf16, #tpu.memory_space<vmem>>, vector<16x32xbf16>
    %c0_1 = arith.constant 0 : index
    %c0_2 = arith.constant 0 : index
    %1 = vector.load %arg2[%c0_1, %c0_2] : memref<32x128xbf16, #tpu.memory_space<vmem>>, vector<32x128xbf16>
    %cst = arith.constant dense<0.000000e+00> : vector<16x128xf32>
    %2 = tpu.matmul %0, %1, %cst {dimension_numbers = #tpu.dot_dimension_numbers<[1], [0], [0], [1], [0, 0, 1, 1], [], []>} : vector<16x32xbf16>, vector<32x128xbf16>, vector<16x128xf32> -> vector<16x128xf32>
    %c0_3 = arith.constant 0 : index
    %c0_4 = arith.constant 0 : index
    %3 = vector.load %arg3[%c0_3, %c0_4] : memref<1x128xf32, #tpu.memory_space<vmem>>, vector<1x128xf32>
    %4 = vector.broadcast %3 : vector<1x128xf32> to vector<16x128xf32>
    %5 = arith.addf %2, %4 : vector<16x128xf32>
    %6 = tpu.iota {dimensions = array<i32: 1>} : vector<16x128xi32>
    %c6_i32 = arith.constant 6 : i32
    %7 = vector.broadcast %c6_i32 : i32 to vector<16x128xi32>
    %8 = arith.cmpi slt, %6, %7 : vector<16x128xi32>
    %c6_i32_5 = arith.constant 6 : i32
    %9 = vector.broadcast %c6_i32_5 : i32 to vector<16x128xi32>
    %10 = arith.cmpi sge, %6, %9 : vector<16x128xi32>
    %c10_i32 = arith.constant 10 : i32
    %11 = vector.broadcast %c10_i32 : i32 to vector<16x128xi32>
    %12 = arith.cmpi slt, %6, %11 : vector<16x128xi32>
    %13 = arith.andi %10, %12 : vector<16x128xi1>
    %cst_6 = arith.constant -1.000000e+30 : f32
    %14 = vector.broadcast %cst_6 : f32 to vector<16x128xf32>
    %15 = arith.select %8, %5, %14 : vector<16x128xi1>, vector<16x128xf32>
    %cst_7 = arith.constant dense<0xFF800000> : vector<16xf32>
    %16 = vector.multi_reduction <maximumf>, %15, %cst_7 [1] : vector<16x128xf32> to vector<16xf32>
    %17 = vector.shape_cast %16 : vector<16xf32> to vector<16x1xf32>
    %cst_8 = arith.constant -1.000000e+30 : f32
    %18 = vector.broadcast %cst_8 : f32 to vector<16x128xf32>
    %19 = arith.select %13, %5, %18 : vector<16x128xi1>, vector<16x128xf32>
    %cst_9 = arith.constant dense<0xFF800000> : vector<16xf32>
    %20 = vector.multi_reduction <maximumf>, %19, %cst_9 [1] : vector<16x128xf32> to vector<16xf32>
    %21 = vector.shape_cast %20 : vector<16xf32> to vector<16x1xf32>
    %22 = arith.ori %8, %13 : vector<16x128xi1>
    %cst_10 = arith.constant -1.000000e+30 : f32
    %23 = vector.broadcast %cst_10 : f32 to vector<16x128xf32>
    %24 = arith.select %22, %5, %23 : vector<16x128xi1>, vector<16x128xf32>
    %25 = vector.shape_cast %17 : vector<16x1xf32> to vector<16x1xf32>
    %26 = vector.broadcast %25 : vector<16x1xf32> to vector<16x128xf32>
    %27 = vector.shape_cast %21 : vector<16x1xf32> to vector<16x1xf32>
    %28 = vector.broadcast %27 : vector<16x1xf32> to vector<16x128xf32>
    %29 = arith.select %8, %26, %28 : vector<16x128xi1>, vector<16x128xf32>
    %30 = arith.subf %24, %29 : vector<16x128xf32>
    %31 = math.exp %30 : vector<16x128xf32>
    %cst_11 = arith.constant 0.000000e+00 : f32
    %32 = vector.broadcast %cst_11 : f32 to vector<16x128xf32>
    %33 = arith.select %8, %31, %32 : vector<16x128xi1>, vector<16x128xf32>
    %cst_12 = arith.constant dense<0.000000e+00> : vector<16xf32>
    %34 = vector.multi_reduction <add>, %33, %cst_12 [1] : vector<16x128xf32> to vector<16xf32>
    %35 = vector.shape_cast %34 : vector<16xf32> to vector<16x1xf32>
    %cst_13 = arith.constant 0.000000e+00 : f32
    %36 = vector.broadcast %cst_13 : f32 to vector<16x128xf32>
    %37 = arith.select %8, %36, %31 : vector<16x128xi1>, vector<16x128xf32>
    %cst_14 = arith.constant dense<0.000000e+00> : vector<16xf32>
    %38 = vector.multi_reduction <add>, %37, %cst_14 [1] : vector<16x128xf32> to vector<16xf32>
    %39 = vector.shape_cast %38 : vector<16xf32> to vector<16x1xf32>
    %40 = vector.shape_cast %35 : vector<16x1xf32> to vector<16x1xf32>
    %41 = vector.broadcast %40 : vector<16x1xf32> to vector<16x128xf32>
    %42 = vector.shape_cast %39 : vector<16x1xf32> to vector<16x1xf32>
    %43 = vector.broadcast %42 : vector<16x1xf32> to vector<16x128xf32>
    %44 = arith.select %8, %41, %43 : vector<16x128xi1>, vector<16x128xf32>
    %45 = arith.divf %31, %44 : vector<16x128xf32>
    %c0_15 = arith.constant 0 : index
    %c0_16 = arith.constant 0 : index
    %46 = vector.load %arg4[%c0_15, %c0_16] : memref<16x128xf32, #tpu.memory_space<vmem>>, vector<16x128xf32>
    tpu.vector_store %arg4[%c0_15, %c0_16], %45 {strides = array<i32>} : memref<16x128xf32, #tpu.memory_space<vmem>>, vector<16x128xf32>,
    return
  }
  func.func @transform_0(%arg0: i32) -> (i32, i32) {
    %c0_i32 = arith.constant 0 : i32
    %c0_i32_0 = arith.constant 0 : i32
    return %arg0, %c0_i32 : i32, i32
  }
  func.func @transform_1(%arg0: i32) -> (i32, i32) {
    %c0_i32 = arith.constant 0 : i32
    %c0_i32_0 = arith.constant 0 : i32
    %c0_i32_1 = arith.constant 0 : i32
    return %c0_i32, %c0_i32_0 : i32, i32
  }
  func.func @transform_2(%arg0: i32) -> (i32, i32) {
    %c0_i32 = arith.constant 0 : i32
    %c0_i32_0 = arith.constant 0 : i32
    %c0_i32_1 = arith.constant 0 : i32
    return %c0_i32, %c0_i32_0 : i32, i32
  }
  func.func @transform_3(%arg0: i32) -> (i32, i32) {
    %c0_i32 = arith.constant 0 : i32
    %c0_i32_0 = arith.constant 0 : i32
    return %arg0, %c0_i32 : i32, i32
  }
}

</mosaic_0001>

<llo_original>
// kernel: classification_model_forward.1
$region0: #{classification_model_forward.1}
  #allocation0 [shape = 'u32[]', space=smem, size = 0x4, offset = 0x4, fixed_abs, tag = 'smem constant byte address 0x4 - core index']
  #allocation1 [shape = 'u32[144,128]{1,0:T(1,128)}', space=vmem, size = 0x12000, scoped, tag = 'internal scratch']
  %s0 = inlined_call_operand.vmem [shape: bf16[16,32], index: 0, kind: input, shape index: {}]
  %s1 = inlined_call_operand.vmem [shape: bf16[32,128], index: 1, kind: input, shape index: {}]
  %s2 = inlined_call_operand.vmem [shape: f32[1,128], index: 2, kind: input, shape index: {}]
  %s3 = inlined_call_operand.vmem [shape: f32[16,128], index: 3, kind: output, shape index: {}]
  %s4 = sld [smem:[#allocation0]]
  $region22: #{classification_model_forward.1} parent=0
    _
  %s6 = ssub.s32 1, %s4
  %s7 = scalar_select 0, %s6, %s4
  // Predicated region
  $region2: #{classification_model_forward.1} parent=0 // pred_check
    _
  $region3: #{classification_model_forward.1} parent=0 // pred_check_branch
    %9 = sbr.rel (0) target = $region5
  $region4: #{classification_model_forward.1} parent=0 // pred_region
    _
  $region5: #{classification_model_forward.1} parent=0 // pred_fallthru
    _
  // Predicated region
  $region6: #{classification_model_forward.1} parent=0 // pred_check
    _
  $region7: #{classification_model_forward.1} parent=0 // pred_check_branch
    %11 = sbr.rel (0) target = $region9
  $region8: #{classification_model_forward.1} parent=0 // pred_region
    _
  $region9: #{classification_model_forward.1} parent=0 // pred_fallthru
    _
  // Predicated region
  $region10: #{classification_model_forward.1} parent=0 // pred_check
    _
  $region11: #{classification_model_forward.1} parent=0 // pred_check_branch
    %13 = sbr.rel (0) target = $region13
  $region12: #{classification_model_forward.1} parent=0 // pred_region
    _
  $region13: #{classification_model_forward.1} parent=0 // pred_fallthru
    _
  %v15 = vld [vmem:[%s0] sm:$0xf]
  %v16 = vld [vmem:[%s0 + $0x4] sm:$0xf]
  %v17 = vld [vmem:[%s1] sm:$0xf]
  %v18 = vld [vmem:[%s1 + $0x4] sm:$0xf]
  %v19 = vld [vmem:[%s1 + $0x8] sm:$0xf]
  %v20 = vld [vmem:[%s1 + $0xc] sm:$0xf]
  %v21 = vld [vmem:[%s2] sm:$0x1]
  %v23 = vlaneseq
  %v24 = vshrl.u32 %v23, 7
  %v25 = vsub.s32 0, %v24
  %v26 = vrot.slane %v21, %v25
  %v30 = vunpack.c.l.b16 %v15
  %v31 = vunpack.c.l.b16 %v16
  %v32 = vpack.c.b16 %v31, %v30
  %v37 = vunpack.c.l.b16 %v17
  %v38 = vunpack.c.l.b16 %v18
  %v39 = vunpack.c.l.b16 %v19
  %v40 = vunpack.c.l.b16 %v20
  %v41 = vpack.c.b16 %v38, %v37
  %v42 = vpack.c.b16 %v40, %v39
  %vm45 = vcmask 261120
  %v47 = vsel %vm45, %v32, 0
  %49 = vmatprep.subr.bf16.mxu0 0
  %50 = vmatpush1.bf16.msra.mxu0 %v41
  %51 = vmatprep.subr.bf16.mxu0 0
  %52 = vmatpush1.bf16.msra.mxu0 %v42
  %53 = vmatprep.subr.bf16.mxu0 0
  %54 = vmatpush1.bf16.msra.mxu0 0
  %55 = vmatprep.subr.bf16.mxu0 0
  %56 = vmatpush1.bf16.msra.mxu0 0
  %57 = vmatprep.subr.bf16.mxu0 0
  %58 = vmatpush1.bf16.msra.mxu0 0
  %59 = vmatprep.subr.bf16.mxu0 0
  %60 = vmatpush1.bf16.msra.mxu0 0
  %61 = vmatprep.subr.bf16.mxu0 0
  %62 = vmatpush1.bf16.msra.mxu0 0
  %63 = vmatprep.subr.bf16.mxu0 0
  %64 = vmatpush1.bf16.msra.mxu0 0
  %65 = vmatprep.subr.bf16.mxu0 0
  %66 = vmatpush1.bf16.msra.mxu0 0
  %67 = vmatprep.subr.bf16.mxu0 0
  %68 = vmatpush1.bf16.msra.mxu0 0
  %69 = vmatprep.subr.bf16.mxu0 0
  %70 = vmatpush1.bf16.msra.mxu0 0
  %71 = vmatprep.subr.bf16.mxu0 0
  %72 = vmatpush1.bf16.msra.mxu0 0
  %73 = vmatprep.subr.bf16.mxu0 0
  %74 = vmatpush1.bf16.msra.mxu0 0
  %75 = vmatprep.subr.bf16.mxu0 0
  %76 = vmatpush1.bf16.msra.mxu0 0
  %77 = vmatprep.subr.bf16.mxu0 0
  %78 = vmatpush1.bf16.msra.mxu0 0
  %79 = vmatprep.subr.bf16.mxu0 0
  %80 = vmatpush1.bf16.msra.mxu0 0
  %81 = vmatprep.mubr.bf16.mxu0 0
  %82 = vmatmul.mubr.bf16.gmra.mrb[0].mxu0 %v47
  %v83 = vpop.f32.mrb[0].mxu0
  %v84 = vadd.f32 %v26, %v83
  %v85 = vpop.f32.mrb[0].mxu0
  %v86 = vpop.f32.mrb[0].mxu0
  %v87 = vadd.f32 %v26, %v86
  %v88 = vpop.f32.mrb[0].mxu0
  %89 = vdwg.mxu0
  %v90 = vlaneseq
  %v91 = vand.u32 %v90, 127
  %vm92 = vcmp.lt.s32.totalorder %v91, 6
  %vm93 = vcmp.ge.s32.totalorder %v91, 6
  %vm94 = vcmp.lt.s32.totalorder %v91, 10
  %vm95 = vmand %vm93, %vm94
  %v96 = vsel %vm92, %v84, -1e+30
  %v97 = vsel %vm92, %v87, -1e+30
  %98 = vmax.xlane.f32.xlu0 %v96
  %v99 = vpop.xlane.xlu0 %98
  %100 = vmax.xlane.f32.xlu0 %v97
  %v101 = vpop.xlane.xlu0 %100
  %v102 = vsel %vm95, %v84, -1e+30
  %v103 = vsel %vm95, %v87, -1e+30
  %104 = vmax.xlane.f32.xlu0 %v102
  %v105 = vpop.xlane.xlu0 %104
  %106 = vmax.xlane.f32.xlu0 %v103
  %v107 = vpop.xlane.xlu0 %106
  %vm108 = vmor %vm92, %vm95
  %v109 = vsel %vm108, %v84, -1e+30
  %v110 = vsel %vm108, %v87, -1e+30
  %v111 = vsel %vm92, %v99, %v105
  %v112 = vsel %vm92, %v101, %v107
  %v113 = vsub.f32 %v109, %v111
  %v114 = vsub.f32 %v110, %v112
  %v115 = vmul.f32 %v113, 1.442695
  %v116 = vpow.pop %v115
  %v117 = vmul.f32 %v114, 1.442695
  %v118 = vpow.pop %v117
  %v119 = vsel %vm92, %v116, 0.0
  %v120 = vsel %vm92, %v118, 0.0
  %121 = vadd.xlane.f32.xlu0 %v119
  %v122 = vpop.xlane.xlu0 %121
  %123 = vadd.xlane.f32.xlu0 %v120
  %v124 = vpop.xlane.xlu0 %123
  %v125 = vsel %vm92, 0.0, %v116
  %v126 = vsel %vm92, 0.0, %v118
  %127 = vadd.xlane.f32.xlu0 %v125
  %v128 = vpop.xlane.xlu0 %127
  %129 = vadd.xlane.f32.xlu0 %v126
  %v130 = vpop.xlane.xlu0 %129
  %v131 = vsel %vm92, %v122, %v128
  %v132 = vsel %vm92, %v124, %v130
  %v133 = vrcp.pop %v131
  %v134 = vmul.f32 %v116, %v133
  %v135 = vrcp.pop %v132
  %v136 = vmul.f32 %v118, %v135
  %137 = vst [vmem:[%s3] sm:$0xff] %v134
  %138 = vst [vmem:[%s3 + $0x8] sm:$0xff] %v136
  // Predicated region
  $region14: #{classification_model_forward.1} parent=0 // pred_check
    _
  $region15: #{classification_model_forward.1} parent=0 // pred_check_branch
    %140 = sbr.rel (0) target = $region17
  $region16: #{classification_model_forward.1} parent=0 // pred_region
    _
  $region17: #{classification_model_forward.1} parent=0 // pred_fallthru
    _
  // Predicated region
  $region18: #{classification_model_forward.1} parent=0 // pred_check
    _
  $region19: #{classification_model_forward.1} parent=0 // pred_check_branch
    %142 = sbr.rel (0) target = $region21
  $region20: #{classification_model_forward.1} parent=0 // pred_region
    _
  $region21: #{classification_model_forward.1} parent=0 // pred_fallthru
    _

</llo_original>
